<compile_context>
chip_gen: v7x
topology: tpu7x:2x2x1
jax: 0.10.0
libtpu: 0.0.40
codegen_flags: <defaults>
</compile_context>

<pallas_src>
import functools
import math

import jax
import jax.numpy as jnp
from jax.experimental import pallas as pl
from jax.experimental.pallas import tpu as pltpu

# -----------------------------------------------------------------------------
# EfficientNet-b0 block configuration (input_ch, output_ch, kernel, stride, expand)
# -----------------------------------------------------------------------------
B0_BLOCKS = [
    (32, 16, 3, 1, 1),
    (16, 24, 3, 2, 6), (24, 24, 3, 1, 6),
    (24, 40, 5, 2, 6), (40, 40, 5, 1, 6),
    (40, 80, 3, 2, 6), (80, 80, 3, 1, 6), (80, 80, 3, 1, 6),
    (80, 112, 5, 1, 6), (112, 112, 5, 1, 6), (112, 112, 5, 1, 6),
    (112, 192, 5, 2, 6), (192, 192, 5, 1, 6), (192, 192, 5, 1, 6), (192, 192, 5, 1, 6),
    (192, 320, 3, 1, 6),
]
STAGE_BOUNDS = [(0, 3), (3, 5), (5, 9), (9, 16)]   # stage_idxs = (3, 5, 9, 16)
DEC_SPECS = [(640, 320, 320), (320, 112, 112), (112, 40, 40),
             (40, 24, 24), (24, 32, 32), (32, 64, 3)]

_VMEM_LIMIT = 32 * 1024 * 1024       # explicit scoped-VMEM budget (safe on v5e/v6e/v7x)


def _round_up(x, m):
    return ((x + m - 1) // m) * m


# -----------------------------------------------------------------------------
# In-kernel activation epilogue (EUP-friendly: exp + approx reciprocal)
# -----------------------------------------------------------------------------
def _apply_act(y, act):
    if act == "relu":
        return jnp.maximum(y, 0.0)
    if act == "swish":
        return y * pl.reciprocal(1.0 + jnp.exp(-y), approx=True)
    if act == "sigmoid":
        return pl.reciprocal(1.0 + jnp.exp(-y), approx=True)
    return y


# -----------------------------------------------------------------------------
# Pallas GEMM: M/N/K-tiled, bf16 MXU inputs, accumulate directly into o_ref
# -----------------------------------------------------------------------------
def _gemm_kernel(a_ref, b_ref, scale_ref, shift_ref, o_ref, *, act):
    @pl.when(pl.program_id(2) == 0)
    def _init():
        o_ref[...] = jnp.zeros_like(o_ref)

    o_ref[...] += jnp.dot(a_ref[...], b_ref[...],
                          preferred_element_type=jnp.float32)

    @pl.when(pl.program_id(2) == pl.num_programs(2) - 1)
    def _fin():
        y = o_ref[...] * scale_ref[...] + shift_ref[...]
        o_ref[...] = _apply_act(y, act)


def _plan_m(M):
    tm = min(256, _round_up(M, 8))
    return tm, _round_up(M, tm)


def _plan_n(N):
    Np = _round_up(N, 128)
    n128 = Np // 128
    d = max(dd for dd in range(1, min(n128, 4) + 1) if n128 % dd == 0)
    return 128 * d, Np


def _plan_k(K):
    if K <= 1024:                       # single full-K step, no activation padding
        return K, K
    Kp = _round_up(K, 128)
    k128 = Kp // 128
    d = max(dd for dd in range(1, 9) if k128 % dd == 0)
    return 128 * d, Kp


@functools.partial(jax.jit, static_argnames=("act",))
def gemm_scale_shift_act(a, b, scale, shift, *, act="none"):
    """out = act((a @ b) * scale + shift); a:(M,K) b:(K,N) scale/shift:(N,)."""
    M, K = a.shape
    _, N = b.shape
    tm, Mp = _plan_m(M)
    tn, Np = _plan_n(N)
    kt, Kp = _plan_k(K)

    a = a.astype(jnp.bfloat16)
    b = b.astype(jnp.bfloat16)
    if (Mp, Kp) != (M, K):
        a = jnp.pad(a, ((0, Mp - M), (0, Kp - K)))
    if (Kp, Np) != (K, N):
        b = jnp.pad(b, ((0, Kp - K), (0, Np - N)))
    scale2 = jnp.pad(scale.astype(jnp.float32), (0, Np - N)).reshape(1, Np)
    shift2 = jnp.pad(shift.astype(jnp.float32), (0, Np - N)).reshape(1, Np)

    out = pl.pallas_call(
        functools.partial(_gemm_kernel, act=act),
        out_shape=jax.ShapeDtypeStruct((Mp, Np), jnp.float32),
        grid_spec=pltpu.PrefetchScalarGridSpec(
            num_scalar_prefetch=0,
            grid=(Mp // tm, Np // tn, Kp // kt),
            in_specs=[
                pl.BlockSpec((tm, kt), lambda i, j, k: (i, k)),
                pl.BlockSpec((kt, tn), lambda i, j, k: (k, j)),
                pl.BlockSpec((1, tn), lambda i, j, k: (0, j)),
                pl.BlockSpec((1, tn), lambda i, j, k: (0, j)),
            ],
            out_specs=pl.BlockSpec((tm, tn), lambda i, j, k: (i, j)),
        ),
        compiler_params=pltpu.CompilerParams(
            dimension_semantics=("parallel", "parallel", "arbitrary"),
            vmem_limit_bytes=_VMEM_LIMIT,
        ),
    )(a, b, scale2, shift2)
    if (Mp, Np) != (M, N):
        out = out[:M, :N]
    return out


# -----------------------------------------------------------------------------
# Pallas depthwise conv: M-tiled, tap-major (KK, M, C) patches
# -----------------------------------------------------------------------------
def _dw_kernel(p_ref, w_ref, scale_ref, shift_ref, o_ref, *, act, kk):
    acc = p_ref[0].astype(jnp.float32) * w_ref[0:1, :]
    for t in range(1, kk):
        acc = acc + p_ref[t].astype(jnp.float32) * w_ref[t:t + 1, :]
    y = acc * scale_ref[...] + shift_ref[...]
    o_ref[...] = _apply_act(y, act)


@functools.partial(jax.jit, static_argnames=("act",))
def dw_scale_shift_act(p, w, scale, shift, *, act="none"):
    """p:(KK, M, C) bf16 patches (tap-major), w:(KK, C) -> (M, C) f32."""
    KK, M, C = p.shape
    budget = 4 * 1024 * 1024                         # per-block patch bytes
    tm = budget // (KK * C * p.dtype.itemsize)
    tm = max(8, min(512, (tm // 8) * 8))
    tm = min(tm, _round_up(M, 8))
    Mp = _round_up(M, tm)
    if Mp != M:
        p = jnp.pad(p, ((0, 0), (0, Mp - M), (0, 0)))
    scale2 = scale.reshape(1, C).astype(jnp.float32)
    shift2 = shift.reshape(1, C).astype(jnp.float32)
    w = w.astype(jnp.float32)

    out = pl.pallas_call(
        functools.partial(_dw_kernel, act=act, kk=KK),
        out_shape=jax.ShapeDtypeStruct((Mp, C), jnp.float32),
        grid_spec=pltpu.PrefetchScalarGridSpec(
            num_scalar_prefetch=0,
            grid=(Mp // tm,),
            in_specs=[
                pl.BlockSpec((KK, tm, C), lambda i: (0, i, 0)),
                pl.BlockSpec((KK, C), lambda i: (0, 0)),
                pl.BlockSpec((1, C), lambda i: (0, 0)),
                pl.BlockSpec((1, C), lambda i: (0, 0)),
            ],
            out_specs=pl.BlockSpec((tm, C), lambda i: (i, 0)),
        ),
        compiler_params=pltpu.CompilerParams(
            dimension_semantics=("parallel",),
            vmem_limit_bytes=_VMEM_LIMIT,
        ),
    )(p, w, scale2, shift2)
    return out[:M] if Mp != M else out


# -----------------------------------------------------------------------------
# Glue: im2col, padding helpers, BN folding
# -----------------------------------------------------------------------------
def _im2col_cols(x, k, stride, pads):
    """x:(N,H,W,C), pads=(top,bottom,left,right) -> list of KK bf16 tap slices."""
    N, H, W, C = x.shape
    pt, pb, pleft, pright = pads
    xp = jnp.pad(x.astype(jnp.bfloat16),
                 ((0, 0), (pt, pb), (pleft, pright), (0, 0)))
    Hp, Wp = H + pt + pb, W + pleft + pright
    Ho = (Hp - k) // stride + 1
    Wo = (Wp - k) // stride + 1
    cols = [xp[:, kh:kh + (Ho - 1) * stride + 1:stride,
               kw:kw + (Wo - 1) * stride + 1:stride, :]
            for kh in range(k) for kw in range(k)]
    return cols, Ho, Wo


def _tf_same_pads(H, W, k, s):
    """TF-style 'same' padding (efficientnet Conv2dStaticSamePadding)."""
    def one(size):
        out = -(-size // s)
        pad = max((out - 1) * s + k - size, 0)
        return pad // 2, pad - pad // 2
    pt, pb = one(H)
    pleft, pright = one(W)
    return (pt, pb, pleft, pright)


def _fold_bn(bias, bn, cout):
    if bn is None:
        scale = jnp.ones((cout,), jnp.float32)
        shift = bias if bias is not None else jnp.zeros((cout,), jnp.float32)
    else:
        gamma, beta, mean, var, eps = bn
        s = gamma / jnp.sqrt(var + eps)
        b0 = bias if bias is not None else 0.0
        scale = s
        shift = (b0 - mean) * s + beta
    return scale, shift


def conv2d(x, w, b, stride, pads, bn=None, act="none"):
    """x:(N,H,W,Cin), w:(k,k,Cin,Cout) -> (N,Ho,Wo,Cout)."""
    N, H, W, Cin = x.shape
    k = w.shape[0]
    Cout = w.shape[-1]
    scale, shift = _fold_bn(b, bn, Cout)
    if k == 1 and stride == 1 and pads == (0, 0, 0, 0):
        A = x.reshape(N * H * W, Cin)               # no im2col for 1x1
        Ho, Wo = H, W
    else:
        cols, Ho, Wo = _im2col_cols(x, k, stride, pads)
        A = jnp.concatenate(cols, axis=-1).reshape(N * Ho * Wo, k * k * Cin)
    B = w.reshape(k * k * Cin, Cout)
    y = gemm_scale_shift_act(A, B, scale, shift, act=act)
    return y.reshape(N, Ho, Wo, Cout)


def depthwise_conv(x, w, stride, pads, bn=None, act="none"):
    """x:(N,H,W,C), w:(k,k,C)."""
    N, H, W, C = x.shape
    k = w.shape[0]
    cols, Ho, Wo = _im2col_cols(x, k, stride, pads)
    p = jnp.stack(cols, axis=0).reshape(k * k, N * Ho * Wo, C)   # tap-major
    scale, shift = _fold_bn(None, bn, C)
    y = dw_scale_shift_act(p, w.reshape(k * k, C), scale, shift, act=act)
    return y.reshape(N, Ho, Wo, C)


def _pad_or_crop(x, pads_lrtb):
    """Replicates F.pad(x, (l, r, t, b)) incl. negative (cropping) pads; NHWC."""
    l, r, t, b = pads_lrtb
    N, H, W, C = x.shape
    x = x[:, max(0, -t):H - max(0, -b), max(0, -l):W - max(0, -r), :]
    return jnp.pad(x, ((0, 0), (max(0, t), max(0, b)),
                       (max(0, l), max(0, r)), (0, 0)))


# -----------------------------------------------------------------------------
# Model pieces
# -----------------------------------------------------------------------------
def mbconv(x, p, cfg):
    cin, cout, k, s, e = cfg
    inp = x
    if e != 1:
        x = conv2d(x, p["expand_w"], None, 1, (0, 0, 0, 0),
                   bn=p["bn0"], act="swish")
    pads = _tf_same_pads(x.shape[1], x.shape[2], k, s)
    x = depthwise_conv(x, p["dw_w"], s, pads, bn=p["bn1"], act="swish")
    # Squeeze-and-excite: tiny (batch x C) FCs -> plain XLA (a 2-row matmul in
    # Pallas is pure per-call overhead; it fuses with mean/sigmoid/mul here).
    se = jnp.mean(x, axis=(1, 2))                                   # (N, Cexp)
    se = jax.nn.silu(se @ p["se_reduce_w"] + p["se_reduce_b"])
    se = jax.nn.sigmoid(se @ p["se_expand_w"] + p["se_expand_b"])
    x = x * se[:, None, None, :]
    # Project
    x = conv2d(x, p["project_w"], None, 1, (0, 0, 0, 0), bn=p["bn2"], act="none")
    if s == 1 and cin == cout:
        x = x + inp          # eval-mode drop_connect == identity
    return x


def decoder_block(x, x_copy, p):
    # ConvTranspose2d(k=2, s=2) expressed as a GEMM then spatial interleave.
    N, H, W, Cin = x.shape
    Wt = p["upT_w"]                                   # (Cin, 2, 2, Cout)
    Cout = Wt.shape[-1]
    A = x.reshape(N * H * W, Cin)
    B = Wt.reshape(Cin, 4 * Cout)
    y = gemm_scale_shift_act(A, B,
                             jnp.ones((4 * Cout,), jnp.float32),
                             p["upT_b4"], act="none")   # bias pre-tiled at build
    y = y.reshape(N, H, W, 2, 2, Cout).transpose(0, 1, 3, 2, 4, 5)
    y = y.reshape(N, 2 * H, 2 * W, Cout)
    # method='' branch of DecoderBlock.forward (pad/crop), original bug kept.
    diffX = x_copy.shape[2] - y.shape[2]
    diffY = x_copy.shape[1] - y.shape[1]
    y = _pad_or_crop(y, (diffX // 2, diffX - diffX // 2,
                         diffY // 2, diffX - diffY // 2))
    x = jnp.concatenate([x_copy, y], axis=-1)
    x = conv2d(x, p["c1_w"], p["c1_b"], 1, (1, 1, 1, 1), bn=p["bn1"], act="relu")
    x = conv2d(x, p["c2_w"], p["c2_b"], 1, (1, 1, 1, 1), bn=p["bn2"], act="relu")
    return x


def effunet_forward(params, x_nchw):
    x = jnp.transpose(x_nchw, (0, 2, 3, 1)).astype(jnp.float32)   # NCHW -> NHWC
    # init_conv (1x1, in_channels -> 3)
    x = conv2d(x, params["init_w"], params["init_b"], 1, (0, 0, 0, 0))
    features = [x]
    # EfficientNet-b0 encoder: stem
    pads = _tf_same_pads(x.shape[1], x.shape[2], 3, 2)
    h = conv2d(x, params["stem_w"], None, 2, pads,
               bn=params["stem_bn"], act="swish")
    features.append(h)
    # MBConv stages
    for lo, hi in STAGE_BOUNDS:
        for bi in range(lo, hi):
            h = mbconv(h, params["blocks"][bi], B0_BLOCKS[bi])
        features.append(h)
    # Middle block (320 -> 640)
    m = params["middle"]
    h = conv2d(features[-1], m["c1_w"], m["c1_b"], 1, (1, 1, 1, 1),
               bn=m["bn1"], act="relu")
    h = conv2d(h, m["c2_w"], m["c2_b"], 1, (1, 1, 1, 1),
               bn=m["bn2"], act="relu")
    # Decoder
    for enc_ft, dp in zip(features[::-1], params["decoders"]):
        h = decoder_block(h, enc_ft, dp)
    # final_conv (1x1, 64 -> nclasses)
    y = conv2d(h, params["final_w"], params["final_b"], 1, (0, 0, 0, 0))
    return jnp.transpose(y, (0, 3, 1, 2))                          # NHWC -> NCHW


# -----------------------------------------------------------------------------
# Deterministic parameter initialization
# -----------------------------------------------------------------------------
def _make_bn(c, eps):
    return (jnp.ones((c,), jnp.float32), jnp.zeros((c,), jnp.float32),
            jnp.zeros((c,), jnp.float32), jnp.ones((c,), jnp.float32), eps)


def build_params(key, in_channels, nclasses):
    keys = iter(jax.random.split(key, 512))

    def nk():
        return next(keys)

    def conv_w(k, cin, cout):
        std = 1.0 / math.sqrt(k * k * cin)
        return std * jax.random.normal(nk(), (k, k, cin, cout), jnp.float32)

    def vec(c):
        return 0.01 * jax.random.normal(nk(), (c,), jnp.float32)

    P = {}
    P["init_w"] = conv_w(1, in_channels, 3)
    P["init_b"] = vec(3)
    P["stem_w"] = conv_w(3, 3, 32)
    P["stem_bn"] = _make_bn(32, 1e-3)

    blocks = []
    for (cin, cout, k, s, e) in B0_BLOCKS:
        cexp = cin * e
        bp = {}
        if e != 1:
            bp["expand_w"] = conv_w(1, cin, cexp)
            bp["bn0"] = _make_bn(cexp, 1e-3)
        bp["dw_w"] = (1.0 / math.sqrt(k * k)) * jax.random.normal(
            nk(), (k, k, cexp), jnp.float32)
        bp["bn1"] = _make_bn(cexp, 1e-3)
        se_c = max(1, int(cin * 0.25))
        bp["se_reduce_w"] = (1.0 / math.sqrt(cexp)) * jax.random.normal(
            nk(), (cexp, se_c), jnp.float32)
        bp["se_reduce_b"] = vec(se_c)
        bp["se_expand_w"] = (1.0 / math.sqrt(se_c)) * jax.random.normal(
            nk(), (se_c, cexp), jnp.float32)
        bp["se_expand_b"] = vec(cexp)
        bp["project_w"] = conv_w(1, cexp, cout)
        bp["bn2"] = _make_bn(cout, 1e-3)
        blocks.append(bp)
    P["blocks"] = blocks

    P["middle"] = {
        "c1_w": conv_w(3, 320, 640), "c1_b": vec(640), "bn1": _make_bn(640, 1e-5),
        "c2_w": conv_w(3, 640, 640), "c2_b": vec(640), "bn2": _make_bn(640, 1e-5),
    }

    decs = []
    for (ci, co, cc) in DEC_SPECS:
        upT_w = (1.0 / math.sqrt(4 * ci)) * jax.random.normal(
            nk(), (ci, 2, 2, co), jnp.float32)
        upT_b = vec(co)
        dp = {
            "upT_w": upT_w,
            "upT_b4": jnp.tile(upT_b, 4),            # bias pre-tiled once at build
            "c1_w": conv_w(3, co + cc, co), "c1_b": vec(co),
            "bn1": _make_bn(co, 1e-5),
            "c2_w": conv_w(3, co, co), "c2_b": vec(co),
            "bn2": _make_bn(co, 1e-5),
        }
        decs.append(dp)
    P["decoders"] = decs

    P["final_w"] = conv_w(1, 64, nclasses)
    P["final_b"] = vec(nclasses)
    return P


# -----------------------------------------------------------------------------
if __name__ == "__main__":
    nclasses, in_channels = 3, 4
    batch, spatial = 2, 32          # spatial a multiple of 32 (5 downsamples)

    params = build_params(jax.random.PRNGKey(42), in_channels, nclasses)
    x = jax.random.normal(jax.random.PRNGKey(0),
                          (batch, in_channels, spatial, spatial), jnp.float32)

    out = effunet_forward(params, x)
    out = jax.block_until_ready(out)
    assert out.shape == (batch, nclasses, spatial, spatial), out.shape
    assert bool(jnp.all(jnp.isfinite(out)))
    print("KERNEL_OK")
</pallas_src>

<mosaic_0001>
module attributes {stable_mosaic.version = 11 : i64} {
  func.func @_gemm_kernel(%arg0: i32, %arg1: i32, %arg2: i32, %arg3: memref<256x4xbf16, #tpu.memory_space<vmem>>, %arg4: memref<4x128xbf16, #tpu.memory_space<vmem>>, %arg5: memref<1x128xf32, #tpu.memory_space<vmem>>, %arg6: memref<1x128xf32, #tpu.memory_space<vmem>>, %arg7: memref<256x128xf32, #tpu.memory_space<vmem>>) attributes {dimension_semantics = [#tpu.dimension_semantics<parallel>, #tpu.dimension_semantics<parallel>, #tpu.dimension_semantics<arbitrary>], iteration_bounds = array<i64: 8, 1, 1>, scalar_prefetch = 0 : i64, scratch_operands = 0 : i64, tpu.core_type = #tpu.core_type<tc>, window_params = [{transform_indices = @transform_0, window_bounds = array<i64: 256, 4>}, {transform_indices = @transform_1, window_bounds = array<i64: 4, 128>}, {transform_indices = @transform_2, window_bounds = array<i64: 1, 128>}, {transform_indices = @transform_3, window_bounds = array<i64: 1, 128>}, {transform_indices = @transform_4, window_bounds = array<i64: 256, 128>}]} {
    %c0_i32 = arith.constant 0 : i32
    %0 = arith.cmpi eq, %arg2, %c0_i32 : i32
    %1 = arith.extui %0 : i1 to i32
    %c0_i32_0 = arith.constant 0 : i32
    %2 = arith.cmpi ne, %1, %c0_i32_0 : i32
    scf.if %2 {
      %cst_10 = arith.constant 0.000000e+00 : f32
      %12 = vector.broadcast %cst_10 : f32 to vector<256x128xf32>
      %c0_11 = arith.constant 0 : index
      %c0_12 = arith.constant 0 : index
      %13 = vector.load %arg7[%c0_11, %c0_12] : memref<256x128xf32, #tpu.memory_space<vmem>>, vector<256x128xf32>
      tpu.vector_store %arg7[%c0_11, %c0_12], %12 {strides = array<i32>} : memref<256x128xf32, #tpu.memory_space<vmem>>, vector<256x128xf32>,
    } else {
    }
    %c0 = arith.constant 0 : index
    %c0_1 = arith.constant 0 : index
    %3 = vector.load %arg7[%c0, %c0_1] : memref<256x128xf32, #tpu.memory_space<vmem>>, vector<256x128xf32>
    %c0_2 = arith.constant 0 : index
    %c0_3 = arith.constant 0 : index
    %4 = vector.load %arg3[%c0_2, %c0_3] : memref<256x4xbf16, #tpu.memory_space<vmem>>, vector<256x4xbf16>
    %c0_4 = arith.constant 0 : index
    %c0_5 = arith.constant 0 : index
    %5 = vector.load %arg4[%c0_4, %c0_5] : memref<4x128xbf16, #tpu.memory_space<vmem>>, vector<4x128xbf16>
    %cst = arith.constant dense<0.000000e+00> : vector<256x128xf32>
    %6 = tpu.matmul %4, %5, %cst {dimension_numbers = #tpu.dot_dimension_numbers<[1], [0], [0], [1], [0, 0, 1, 1], [], []>} : vector<256x4xbf16>, vector<4x128xbf16>, vector<256x128xf32> -> vector<256x128xf32>
    %7 = arith.addf %3, %6 : vector<256x128xf32>
    %c0_6 = arith.constant 0 : index
    %c0_7 = arith.constant 0 : index
    %8 = vector.load %arg7[%c0_6, %c0_7] : memref<256x128xf32, #tpu.memory_space<vmem>>, vector<256x128xf32>
    tpu.vector_store %arg7[%c0_6, %c0_7], %7 {strides = array<i32>} : memref<256x128xf32, #tpu.memory_space<vmem>>, vector<256x128xf32>,
    %c0_i32_8 = arith.constant 0 : i32
    %9 = arith.cmpi eq, %arg2, %c0_i32_8 : i32
    %10 = arith.extui %9 : i1 to i32
    %c0_i32_9 = arith.constant 0 : i32
    %11 = arith.cmpi ne, %10, %c0_i32_9 : i32
    scf.if %11 {
      %c0_10 = arith.constant 0 : index
      %c0_11 = arith.constant 0 : index
      %12 = vector.load %arg7[%c0_10, %c0_11] : memref<256x128xf32, #tpu.memory_space<vmem>>, vector<256x128xf32>
      %c0_12 = arith.constant 0 : index
      %c0_13 = arith.constant 0 : index
      %13 = vector.load %arg5[%c0_12, %c0_13] : memref<1x128xf32, #tpu.memory_space<vmem>>, vector<1x128xf32>
      %14 = vector.broadcast %13 : vector<1x128xf32> to vector<256x128xf32>
      %15 = arith.mulf %12, %14 : vector<256x128xf32>
      %c0_14 = arith.constant 0 : index
      %c0_15 = arith.constant 0 : index
      %16 = vector.load %arg6[%c0_14, %c0_15] : memref<1x128xf32, #tpu.memory_space<vmem>>, vector<1x128xf32>
      %17 = vector.broadcast %16 : vector<1x128xf32> to vector<256x128xf32>
      %18 = arith.addf %15, %17 : vector<256x128xf32>
      %c0_16 = arith.constant 0 : index
      %c0_17 = arith.constant 0 : index
      %19 = vector.load %arg7[%c0_16, %c0_17] : memref<256x128xf32, #tpu.memory_space<vmem>>, vector<256x128xf32>
      tpu.vector_store %arg7[%c0_16, %c0_17], %18 {strides = array<i32>} : memref<256x128xf32, #tpu.memory_space<vmem>>, vector<256x128xf32>,
    } else {
    }
    return
  }
  func.func @transform_0(%arg0: i32, %arg1: i32, %arg2: i32) -> (i32, i32) {
    %c0_i32 = arith.constant 0 : i32
    return %arg0, %arg2 : i32, i32
  }
  func.func @transform_1(%arg0: i32, %arg1: i32, %arg2: i32) -> (i32, i32) {
    %c0_i32 = arith.constant 0 : i32
    return %arg2, %arg1 : i32, i32
  }
  func.func @transform_2(%arg0: i32, %arg1: i32, %arg2: i32) -> (i32, i32) {
    %c0_i32 = arith.constant 0 : i32
    %c0_i32_0 = arith.constant 0 : i32
    return %c0_i32, %arg1 : i32, i32
  }
  func.func @transform_3(%arg0: i32, %arg1: i32, %arg2: i32) -> (i32, i32) {
    %c0_i32 = arith.constant 0 : i32
    %c0_i32_0 = arith.constant 0 : i32
    return %c0_i32, %arg1 : i32, i32
  }
  func.func @transform_4(%arg0: i32, %arg1: i32, %arg2: i32) -> (i32, i32) {
    %c0_i32 = arith.constant 0 : i32
    return %arg0, %arg1 : i32, i32
  }
}

</mosaic_0001>

<llo_original>
// kernel: gemm_scale_shift_act.1
$region0: #{gemm_scale_shift_act.1}
  #allocation0 [shape = 'u32[]', space=smem, size = 0x4, offset = 0x4, fixed_abs, tag = 'smem constant byte address 0x4 - core index']
  #allocation1 [shape = 'u32[144,128]{1,0:T(1,128)}', space=vmem, size = 0x12000, scoped, tag = 'internal scratch']
  %s0 = inlined_call_operand.vmem [shape: bf16[2048,4], index: 0, kind: input, shape index: {}]
  %s1 = inlined_call_operand.vmem [shape: bf16[4,128], index: 1, kind: input, shape index: {}]
  %s2 = inlined_call_operand.vmem [shape: f32[1,128], index: 2, kind: input, shape index: {}]
  %s3 = inlined_call_operand.vmem [shape: f32[1,128], index: 3, kind: input, shape index: {}]
  %s4 = inlined_call_operand.vmem [shape: f32[2048,128], index: 4, kind: output, shape index: {}]
  %s5 = sld [smem:[#allocation0]]
  $region57: #{gemm_scale_shift_act.1} parent=0
    _
  %s7 = ssub.s32 1, %s5
  %s8 = scalar_select 0, %s7, %s5
  loop: start=0, step=1, limit=10
  $region2: #{gemm_scale_shift_act.1} parent=0 // loop_pre_header
    _
  $region3: #{gemm_scale_shift_act.1} parent=0 // loop_header
    %s10 = sphi 0, %s14
    %p11 = scmp.ge.s32.totalorder %s10, 10
    %s17 = sphi 0, %s36
    %s18 = sphi 0, %s32
    %s19 = sphi 0, %s28
    %s20 = sphi 0, %s17
    %s21 = sphi 0, %s18
    %s22 = sphi 0, %s19
    %s23 = sphi 0, %s20
    %s24 = sphi 0, %s21
    %s25 = sphi 0, %s22
    %s41 = sphi 0, %s43
    %s44 = sphi 0, %s41
    %s45 = sphi 0, %s44
    %s61 = sphi 0, %s45
    %s69 = sphi 0, %s71
    %s72 = sphi 0, %s69
    %s73 = sphi 0, %s72
    %s89 = sphi 0, %s73
    %s95 = sphi 0, %s97
    %s98 = sphi 0, %s95
    %s99 = sphi 0, %s98
    %s115 = sphi 0, %s99
    %s121 = sphi 0, %s123
    %s124 = sphi 0, %s121
    %s125 = sphi 0, %s124
    %s141 = sphi 0, %s125
    %s149 = sphi 0, %s151
    %s152 = sphi 0, %s149
    %s153 = sphi 0, %s152
    %s169 = sphi 0, %s153
  $region4: #{gemm_scale_shift_act.1} parent=0 // loop_header_branch
    %13 = sbr.rel (%p11) target = $region8
  $region5: #{gemm_scale_shift_act.1} parent=0 // loop_body
    %s15 = ssub.s32 %s10, 1
    %s16 = ssub.s32 %s10, 2
    %s26 = sadd.s32 1, %s19
    %p27 = scmp.ge.s32.totalorder %s26, 1
    %s28 = scalar_select %p27, 0, %s26
    %s29 = sadd.s32 1, %s18
    %s30 = scalar_select %p27, %s29, %s18
    %p31 = scmp.ge.s32.totalorder %s30, 1
    %s32 = scalar_select %p31, 0, %s30
    %s33 = sadd.s32 1, %s17
    %s34 = scalar_select %p31, %s33, %s17
    %p35 = scmp.ge.s32.totalorder %s34, 8
    %s36 = scalar_select %p35, 0, %s34
    %s37 = ssub.s32 %s17, %s36
    %s38 = ssub.s32 %s19, %s28
    %s39 = sor.u32 %s37, %s38
    %p40 = scmp.eq.s32.totalorder %s39, 0
    %s42 = sadd.s32 %s41, 1
    %s43 = scalar_select %p40, %s41, %s42
    %p46 = pneg %p40
    %p47 = scmp.eq.s32.totalorder %s10, 7
    %p48 = por %p46, %p47
    %p49 = scmp.ne.s32.totalorder %s41, %s44
    %p50 = scmp.eq.s32.totalorder %s10, 0
    %p51 = por %p49, %p50
    %p52 = scmp.ne.s32.totalorder %s41, %s44
    %p53 = scmp.eq.s32.totalorder %s15, 7
    %p54 = por %p52, %p53
    %p55 = scmp.ne.s32.totalorder %s44, %s45
    %p56 = scmp.eq.s32.totalorder %s15, 0
    %p57 = por %p55, %p56
    %p58 = scmp.ne.s32.totalorder %s44, %s45
    %p59 = scmp.eq.s32.totalorder %s16, 7
    %p60 = por %p58, %p59
    %p62 = scmp.ne.s32.totalorder %s45, %s61
    %p63 = scmp.eq.s32.totalorder %s16, 0
    %p64 = por %p62, %p63
    %s65 = ssub.s32 %s19, %s28
    %s66 = ssub.s32 %s18, %s32
    %s67 = sor.u32 %s65, %s66
    %p68 = scmp.eq.s32.totalorder %s67, 0
    %s70 = sadd.s32 %s69, 1
    %s71 = scalar_select %p68, %s69, %s70
    %p74 = pneg %p68
    %p75 = scmp.eq.s32.totalorder %s10, 7
    %p76 = por %p74, %p75
    %p77 = scmp.ne.s32.totalorder %s69, %s72
    %p78 = scmp.eq.s32.totalorder %s10, 0
    %p79 = por %p77, %p78
    %p80 = scmp.ne.s32.totalorder %s69, %s72
    %p81 = scmp.eq.s32.totalorder %s15, 7
    %p82 = por %p80, %p81
    %p83 = scmp.ne.s32.totalorder %s72, %s73
    %p84 = scmp.eq.s32.totalorder %s15, 0
    %p85 = por %p83, %p84
    %p86 = scmp.ne.s32.totalorder %s72, %s73
    %p87 = scmp.eq.s32.totalorder %s16, 7
    %p88 = por %p86, %p87
    %p90 = scmp.ne.s32.totalorder %s73, %s89
    %p91 = scmp.eq.s32.totalorder %s16, 0
    %p92 = por %p90, %p91
    %s93 = ssub.s32 %s18, %s32
    %p94 = scmp.eq.s32.totalorder %s93, 0
    %s96 = sadd.s32 %s95, 1
    %s97 = scalar_select %p94, %s95, %s96
    %p100 = pneg %p94
    %p101 = scmp.eq.s32.totalorder %s10, 7
    %p102 = por %p100, %p101
    %p103 = scmp.ne.s32.totalorder %s95, %s98
    %p104 = scmp.eq.s32.totalorder %s10, 0
    %p105 = por %p103, %p104
    %p106 = scmp.ne.s32.totalorder %s95, %s98
    %p107 = scmp.eq.s32.totalorder %s15, 7
    %p108 = por %p106, %p107
    %p109 = scmp.ne.s32.totalorder %s98, %s99
    %p110 = scmp.eq.s32.totalorder %s15, 0
    %p111 = por %p109, %p110
    %p112 = scmp.ne.s32.totalorder %s98, %s99
    %p113 = scmp.eq.s32.totalorder %s16, 7
    %p114 = por %p112, %p113
    %p116 = scmp.ne.s32.totalorder %s99, %s115
    %p117 = scmp.eq.s32.totalorder %s16, 0
    %p118 = por %p116, %p117
    %s119 = ssub.s32 %s18, %s32
    %p120 = scmp.eq.s32.totalorder %s119, 0
    %s122 = sadd.s32 %s121, 1
    %s123 = scalar_select %p120, %s121, %s122
    %p126 = pneg %p120
    %p127 = scmp.eq.s32.totalorder %s10, 7
    %p128 = por %p126, %p127
    %p129 = scmp.ne.s32.totalorder %s121, %s124
    %p130 = scmp.eq.s32.totalorder %s10, 0
    %p131 = por %p129, %p130
    %p132 = scmp.ne.s32.totalorder %s121, %s124
    %p133 = scmp.eq.s32.totalorder %s15, 7
    %p134 = por %p132, %p133
    %p135 = scmp.ne.s32.totalorder %s124, %s125
    %p136 = scmp.eq.s32.totalorder %s15, 0
    %p137 = por %p135, %p136
    %p138 = scmp.ne.s32.totalorder %s124, %s125
    %p139 = scmp.eq.s32.totalorder %s16, 7
    %p140 = por %p138, %p139
    %p142 = scmp.ne.s32.totalorder %s125, %s141
    %p143 = scmp.eq.s32.totalorder %s16, 0
    %p144 = por %p142, %p143
    %s145 = ssub.s32 %s17, %s36
    %s146 = ssub.s32 %s18, %s32
    %s147 = sor.u32 %s145, %s146
    %p148 = scmp.eq.s32.totalorder %s147, 0
    %s150 = sadd.s32 %s149, 1
    %s151 = scalar_select %p148, %s149, %s150
    %p154 = pneg %p148
    %p155 = scmp.eq.s32.totalorder %s10, 7
    %p156 = por %p154, %p155
    %p157 = scmp.ne.s32.totalorder %s149, %s152
    %p158 = scmp.eq.s32.totalorder %s10, 0
    %p159 = por %p157, %p158
    %p160 = scmp.ne.s32.totalorder %s149, %s152
    %p161 = scmp.eq.s32.totalorder %s15, 7
    %p162 = por %p160, %p161
    %p163 = scmp.ne.s32.totalorder %s152, %s153
    %p164 = scmp.eq.s32.totalorder %s15, 0
    %p165 = por %p163, %p164
    %p166 = scmp.ne.s32.totalorder %s152, %s153
    %p167 = scmp.eq.s32.totalorder %s16, 7
    %p168 = por %p166, %p167
    %p170 = scmp.ne.s32.totalorder %s153, %s169
    %p171 = scmp.eq.s32.totalorder %s16, 0
    %p172 = por %p170, %p171
    %p173 = scmp.le.s32.totalorder 1, %s10
    %p174 = scmp.lt.s32.totalorder %s10, 9
    %p175 = pnand %p173, %p174
    %p176 = pneg %p175
    // Predicated region
    $region9: #{gemm_scale_shift_act.1} parent=5 // pred_check
      _
    $region10: #{gemm_scale_shift_act.1} parent=5 // pred_check_branch
      %178 = sbr.rel (%p175) target = $region12
    $region11: #{gemm_scale_shift_act.1} parent=5 // pred_region
      %s179 = ssub.s32 %s10, 1
      // Predicated region
      $region13: #{gemm_scale_shift_act.1} parent=11 // pred_check
        %p180 = pneg %p85
      $region14: #{gemm_scale_shift_act.1} parent=11 // pred_check_branch
        %182 = sbr.rel (%p180) target = $region16
      $region15: #{gemm_scale_shift_act.1} parent=11 // pred_region
        %p183 = scmp.lt.s32.totalorder %s22, 0
        %s184 = scalar_select %p183, %s22, 0
        %p185 = scmp.lt.s32.totalorder %s21, 0
        %s186 = scalar_select %p185, %s21, 0
        %s187 = sadd.s32 %s186, %s184
        %s188 = smul.addr %s187, 2
        %s189 = scalar_lea.vmem %s1, %s188
      $region16: #{gemm_scale_shift_act.1} parent=11 // pred_fallthru
        _
      // Predicated region
      $region17: #{gemm_scale_shift_act.1} parent=11 // pred_check
        %p190 = pneg %p111
      $region18: #{gemm_scale_shift_act.1} parent=11 // pred_check_branch
        %192 = sbr.rel (%p190) target = $region20
      $region19: #{gemm_scale_shift_act.1} parent=11 // pred_region
        %p193 = scmp.lt.s32.totalorder %s21, 0
        %s194 = scalar_select %p193, %s21, 0
        %s195 = scalar_lea.vmem %s2, %s194
      $region20: #{gemm_scale_shift_act.1} parent=11 // pred_fallthru
        _
      // Predicated region
      $region21: #{gemm_scale_shift_act.1} parent=11 // pred_check
        %p196 = pneg %p137
      $region22: #{gemm_scale_shift_act.1} parent=11 // pred_check_branch
        %198 = sbr.rel (%p196) target = $region24
      $region23: #{gemm_scale_shift_act.1} parent=11 // pred_region
        %p199 = scmp.lt.s32.totalorder %s21, 0
        %s200 = scalar_select %p199, %s21, 0
        %s201 = scalar_lea.vmem %s3, %s200
      $region24: #{gemm_scale_shift_act.1} parent=11 // pred_fallthru
        _
    $region12: #{gemm_scale_shift_act.1} parent=5 // pred_fallthru
      _
    %p202 = scmp.lt.s32.totalorder %s10, 8
    // Predicated region
    $region25: #{gemm_scale_shift_act.1} parent=5 // pred_check
      %p203 = pneg %p202
    $region26: #{gemm_scale_shift_act.1} parent=5 // pred_check_branch
      %205 = sbr.rel (%p203) target = $region28
    $region27: #{gemm_scale_shift_act.1} parent=5 // pred_region
      // Predicated region
      $region29: #{gemm_scale_shift_act.1} parent=27 // pred_check
        %p206 = pneg %p51
      $region30: #{gemm_scale_shift_act.1} parent=27 // pred_check_branch
        %208 = sbr.rel (%p206) target = $region32
      $region31: #{gemm_scale_shift_act.1} parent=27 // pred_region
        %s209 = smul.u32 32, %s17
        %p210 = scmp.lt.s32.totalorder %s209, 255
        %s211 = scalar_select %p210, %s209, 255
        %p212 = scmp.lt.s32.totalorder %s19, 0
        %s213 = scalar_select %p212, %s19, 0
        %s214 = sadd.s32 %s213, %s211
        %s215 = smul.addr %s214, 4
        %s216 = scalar_lea.vmem %s0, %s215
        %s217 = smul.u32 32, %s17
      $region32: #{gemm_scale_shift_act.1} parent=27 // pred_fallthru
        _
    $region28: #{gemm_scale_shift_act.1} parent=5 // pred_fallthru
      _
    %p218 = scmp.le.s32.totalorder 1, %s10
    %p219 = scmp.lt.s32.totalorder %s10, 9
    %p220 = pnand %p218, %p219
    %p221 = pneg %p220
    // Predicated region
    $region33: #{gemm_scale_shift_act.1} parent=5 // pred_check
      _
    $region34: #{gemm_scale_shift_act.1} parent=5 // pred_check_branch
      %223 = sbr.rel (%p220) target = $region36
    $region35: #{gemm_scale_shift_act.1} parent=5 // pred_region
      %s224 = ssub.s32 %s10, 1
      %s225 = smul.u32 32, %s20
      %p226 = scmp.lt.s32.totalorder %s225, 255
      %s227 = scalar_select %p226, %s225, 255
      %p228 = scmp.lt.s32.totalorder %s22, 0
      %s229 = scalar_select %p228, %s22, 0
      %s230 = sadd.s32 %s229, %s227
      %s231 = smul.addr %s230, 4
      %s232 = scalar_lea.vmem %s0, %s231
      %p233 = pneg %p57
      %p234 = pneg %p54
      %p235 = scmp.lt.s32.totalorder %s22, 0
      %s236 = scalar_select %p235, %s22, 0
      %p237 = scmp.lt.s32.totalorder %s21, 0
      %s238 = scalar_select %p237, %s21, 0
      %s239 = sadd.s32 %s238, %s236
      %s240 = smul.addr %s239, 2
      %s241 = scalar_lea.vmem %s1, %s240
      %p242 = pneg %p85
      %p243 = pneg %p82
      %p244 = scmp.lt.s32.totalorder %s21, 0
      %s245 = scalar_select %p244, %s21, 0
      %s246 = scalar_lea.vmem %s2, %s245
      %p247 = pneg %p111
      %p248 = pneg %p108
      %p249 = scmp.lt.s32.totalorder %s21, 0
      %s250 = scalar_select %p249, %s21, 0
      %s251 = scalar_lea.vmem %s3, %s250
      %p252 = pneg %p137
      %p253 = pneg %p134
      %p254 = pneg %p165
      %p255 = pneg %p162
      %s256 = smul.u32 32, %s20
      %p257 = scmp.lt.s32.totalorder %s256, 255
      %s258 = scalar_select %p257, %s256, 255
      %p259 = scmp.lt.s32.totalorder %s21, 0
      %s260 = scalar_select %p259, %s21, 0
      %s261 = sadd.s32 %s260, %s258
      %s262 = smul.addr %s261, 8
      %s263 = scalar_lea.vmem %s4, %s262
      %s264 = smul.u32 32, %s20
      %p265 = scmp.lt.s32.totalorder %s264, 255
      %s266 = scalar_select %p265, %s264, 255
      %p267 = scmp.lt.s32.totalorder %s22, 0
      %s268 = scalar_select %p267, %s22, 0
      %s269 = sadd.s32 %s268, %s266
      %s270 = smul.addr %s269, 4
      %s271 = scalar_lea.vmem %s0, %s270
      %s272 = smul.u32 32, %s20
      %p273 = scmp.lt.s32.totalorder %s22, 0
      %s274 = scalar_select %p273, %s22, 0
      %p275 = scmp.lt.s32.totalorder %s21, 0
      %s276 = scalar_select %p275, %s21, 0
      %s277 = sadd.s32 %s276, %s274
      %s278 = smul.addr %s277, 2
      %s279 = scalar_lea.vmem %s1, %s278
      %p280 = scmp.lt.s32.totalorder %s21, 0
      %s281 = scalar_select %p280, %s21, 0
      %s282 = scalar_lea.vmem %s2, %s281
      %p283 = scmp.lt.s32.totalorder %s21, 0
      %s284 = scalar_select %p283, %s21, 0
      %s285 = scalar_lea.vmem %s3, %s284
      %s286 = smul.u32 32, %s20
      %p287 = scmp.lt.s32.totalorder %s286, 255
      %s288 = scalar_select %p287, %s286, 255
      %p289 = scmp.lt.s32.totalorder %s21, 0
      %s290 = scalar_select %p289, %s21, 0
      %s291 = sadd.s32 %s290, %s288
      %s292 = smul.addr %s291, 8
      %s293 = scalar_lea.vmem %s4, %s292
      %s294 = smul.u32 32, %s20
      %p296 = scmp.eq.s32.totalorder %s22, 0
      // Predicated region
      $region37: #{gemm_scale_shift_act.1} parent=35 // pred_check
        %p297 = pneg %p296
      $region38: #{gemm_scale_shift_act.1} parent=35 // pred_check_branch
        %299 = sbr.rel (%p297) target = $region40
      $region39: #{gemm_scale_shift_act.1} parent=35 // pred_region
        %300 = vst [vmem:[%s293] sm:$0xff] 0.0
        %301 = vst [vmem:[%s293 + $0x8] sm:$0xff] 0.0
        %302 = vst [vmem:[%s293 + $0x10] sm:$0xff] 0.0
        %303 = vst [vmem:[%s293 + $0x18] sm:$0xff] 0.0
        %304 = vst [vmem:[%s293 + $0x20] sm:$0xff] 0.0
        %305 = vst [vmem:[%s293 + $0x28] sm:$0xff] 0.0
        %306 = vst [vmem:[%s293 + $0x30] sm:$0xff] 0.0
        %307 = vst [vmem:[%s293 + $0x38] sm:$0xff] 0.0
        %308 = vst [vmem:[%s293 + $0x40] sm:$0xff] 0.0
        %309 = vst [vmem:[%s293 + $0x48] sm:$0xff] 0.0
        %310 = vst [vmem:[%s293 + $0x50] sm:$0xff] 0.0
        %311 = vst [vmem:[%s293 + $0x58] sm:$0xff] 0.0
        %312 = vst [vmem:[%s293 + $0x60] sm:$0xff] 0.0
        %313 = vst [vmem:[%s293 + $0x68] sm:$0xff] 0.0
        %314 = vst [vmem:[%s293 + $0x70] sm:$0xff] 0.0
        %315 = vst [vmem:[%s293 + $0x78] sm:$0xff] 0.0
        %316 = vst [vmem:[%s293 + $0x80] sm:$0xff] 0.0
        %317 = vst [vmem:[%s293 + $0x88] sm:$0xff] 0.0
        %318 = vst [vmem:[%s293 + $0x90] sm:$0xff] 0.0
        %319 = vst [vmem:[%s293 + $0x98] sm:$0xff] 0.0
        %320 = vst [vmem:[%s293 + $0xa0] sm:$0xff] 0.0
        %321 = vst [vmem:[%s293 + $0xa8] sm:$0xff] 0.0
        %322 = vst [vmem:[%s293 + $0xb0] sm:$0xff] 0.0
        %323 = vst [vmem:[%s293 + $0xb8] sm:$0xff] 0.0
        %324 = vst [vmem:[%s293 + $0xc0] sm:$0xff] 0.0
        %325 = vst [vmem:[%s293 + $0xc8] sm:$0xff] 0.0
        %326 = vst [vmem:[%s293 + $0xd0] sm:$0xff] 0.0
        %327 = vst [vmem:[%s293 + $0xd8] sm:$0xff] 0.0
        %328 = vst [vmem:[%s293 + $0xe0] sm:$0xff] 0.0
        %329 = vst [vmem:[%s293 + $0xe8] sm:$0xff] 0.0
        %330 = vst [vmem:[%s293 + $0xf0] sm:$0xff] 0.0
        %331 = vst [vmem:[%s293 + $0xf8] sm:$0xff] 0.0
      $region40: #{gemm_scale_shift_act.1} parent=35 // pred_fallthru
        _
      %v332 = vld [vmem:[%s293] sm:$0xff]
      %v333 = vld [vmem:[%s293 + $0x8] sm:$0xff]
      %v334 = vld [vmem:[%s293 + $0x10] sm:$0xff]
      %v335 = vld [vmem:[%s293 + $0x18] sm:$0xff]
      %v336 = vld [vmem:[%s293 + $0x20] sm:$0xff]
      %v337 = vld [vmem:[%s293 + $0x28] sm:$0xff]
      %v338 = vld [vmem:[%s293 + $0x30] sm:$0xff]
      %v339 = vld [vmem:[%s293 + $0x38] sm:$0xff]
      %v340 = vld [vmem:[%s293 + $0x40] sm:$0xff]
      %v341 = vld [vmem:[%s293 + $0x48] sm:$0xff]
      %v342 = vld [vmem:[%s293 + $0x50] sm:$0xff]
      %v343 = vld [vmem:[%s293 + $0x58] sm:$0xff]
      %v344 = vld [vmem:[%s293 + $0x60] sm:$0xff]
      %v345 = vld [vmem:[%s293 + $0x68] sm:$0xff]
      %v346 = vld [vmem:[%s293 + $0x70] sm:$0xff]
      %v347 = vld [vmem:[%s293 + $0x78] sm:$0xff]
      %v348 = vld [vmem:[%s293 + $0x80] sm:$0xff]
      %v349 = vld [vmem:[%s293 + $0x88] sm:$0xff]
      %v350 = vld [vmem:[%s293 + $0x90] sm:$0xff]
      %v351 = vld [vmem:[%s293 + $0x98] sm:$0xff]
      %v352 = vld [vmem:[%s293 + $0xa0] sm:$0xff]
      %v353 = vld [vmem:[%s293 + $0xa8] sm:$0xff]
      %v354 = vld [vmem:[%s293 + $0xb0] sm:$0xff]
      %v355 = vld [vmem:[%s293 + $0xb8] sm:$0xff]
      %v356 = vld [vmem:[%s293 + $0xc0] sm:$0xff]
      %v357 = vld [vmem:[%s293 + $0xc8] sm:$0xff]
      %v358 = vld [vmem:[%s293 + $0xd0] sm:$0xff]
      %v359 = vld [vmem:[%s293 + $0xd8] sm:$0xff]
      %v360 = vld [vmem:[%s293 + $0xe0] sm:$0xff]
      %v361 = vld [vmem:[%s293 + $0xe8] sm:$0xff]
      %v362 = vld [vmem:[%s293 + $0xf0] sm:$0xff]
      %v363 = vld [vmem:[%s293 + $0xf8] sm:$0xff]
      %v364 = vld [vmem:[%s271] sm:$0xf]
      %v365 = vld [vmem:[%s271 + $0x4] sm:$0xf]
      %v366 = vld [vmem:[%s271 + $0x8] sm:$0xf]
      %v367 = vld [vmem:[%s271 + $0xc] sm:$0xf]
      %v368 = vld [vmem:[%s271 + $0x10] sm:$0xf]
      %v369 = vld [vmem:[%s271 + $0x14] sm:$0xf]
      %v370 = vld [vmem:[%s271 + $0x18] sm:$0xf]
      %v371 = vld [vmem:[%s271 + $0x1c] sm:$0xf]
      %v372 = vld [vmem:[%s271 + $0x20] sm:$0xf]
      %v373 = vld [vmem:[%s271 + $0x24] sm:$0xf]
      %v374 = vld [vmem:[%s271 + $0x28] sm:$0xf]
      %v375 = vld [vmem:[%s271 + $0x2c] sm:$0xf]
      %v376 = vld [vmem:[%s271 + $0x30] sm:$0xf]
      %v377 = vld [vmem:[%s271 + $0x34] sm:$0xf]
      %v378 = vld [vmem:[%s271 + $0x38] sm:$0xf]
      %v379 = vld [vmem:[%s271 + $0x3c] sm:$0xf]
      %v380 = vld [vmem:[%s271 + $0x40] sm:$0xf]
      %v381 = vld [vmem:[%s271 + $0x44] sm:$0xf]
      %v382 = vld [vmem:[%s271 + $0x48] sm:$0xf]
      %v383 = vld [vmem:[%s271 + $0x4c] sm:$0xf]
      %v384 = vld [vmem:[%s271 + $0x50] sm:$0xf]
      %v385 = vld [vmem:[%s271 + $0x54] sm:$0xf]
      %v386 = vld [vmem:[%s271 + $0x58] sm:$0xf]
      %v387 = vld [vmem:[%s271 + $0x5c] sm:$0xf]
      %v388 = vld [vmem:[%s271 + $0x60] sm:$0xf]
      %v389 = vld [vmem:[%s271 + $0x64] sm:$0xf]
      %v390 = vld [vmem:[%s271 + $0x68] sm:$0xf]
      %v391 = vld [vmem:[%s271 + $0x6c] sm:$0xf]
      %v392 = vld [vmem:[%s271 + $0x70] sm:$0xf]
      %v393 = vld [vmem:[%s271 + $0x74] sm:$0xf]
      %v394 = vld [vmem:[%s271 + $0x78] sm:$0xf]
      %v395 = vld [vmem:[%s271 + $0x7c] sm:$0xf]
      %v396 = vld [vmem:[%s279] sm:$0x3]
      %v429 = vunpack.c.l.b16 %v364
      %v430 = vunpack.c.l.b16 %v365
      %v431 = vunpack.c.l.b16 %v366
      %v432 = vunpack.c.l.b16 %v367
      %v433 = vunpack.c.l.b16 %v368
      %v434 = vunpack.c.l.b16 %v369
      %v435 = vunpack.c.l.b16 %v370
      %v436 = vunpack.c.l.b16 %v371
      %v437 = vunpack.c.l.b16 %v372
      %v438 = vunpack.c.l.b16 %v373
      %v439 = vunpack.c.l.b16 %v374
      %v440 = vunpack.c.l.b16 %v375
      %v441 = vunpack.c.l.b16 %v376
      %v442 = vunpack.c.l.b16 %v377
      %v443 = vunpack.c.l.b16 %v378
      %v444 = vunpack.c.l.b16 %v379
      %v445 = vunpack.c.l.b16 %v380
      %v446 = vunpack.c.l.b16 %v381
      %v447 = vunpack.c.l.b16 %v382
      %v448 = vunpack.c.l.b16 %v383
      %v449 = vunpack.c.l.b16 %v384
      %v450 = vunpack.c.l.b16 %v385
      %v451 = vunpack.c.l.b16 %v386
      %v452 = vunpack.c.l.b16 %v387
      %v453 = vunpack.c.l.b16 %v388
      %v454 = vunpack.c.l.b16 %v389
      %v455 = vunpack.c.l.b16 %v390
      %v456 = vunpack.c.l.b16 %v391
      %v457 = vunpack.c.l.b16 %v392
      %v458 = vunpack.c.l.b16 %v393
      %v459 = vunpack.c.l.b16 %v394
      %v460 = vunpack.c.l.b16 %v395
      %v461 = vpack.c.b16 %v430, %v429
      %v462 = vpack.c.b16 %v432, %v431
      %v463 = vpack.c.b16 %v434, %v433
      %v464 = vpack.c.b16 %v436, %v435
      %v465 = vpack.c.b16 %v438, %v437
      %v466 = vpack.c.b16 %v440, %v439
      %v467 = vpack.c.b16 %v442, %v441
      %v468 = vpack.c.b16 %v444, %v443
      %v469 = vpack.c.b16 %v446, %v445
      %v470 = vpack.c.b16 %v448, %v447
      %v471 = vpack.c.b16 %v450, %v449
      %v472 = vpack.c.b16 %v452, %v451
      %v473 = vpack.c.b16 %v454, %v453
      %v474 = vpack.c.b16 %v456, %v455
      %v475 = vpack.c.b16 %v458, %v457
      %v476 = vpack.c.b16 %v460, %v459
      %vm477 = vcmask 31744
      %v479 = vsel %vm477, %v461, 0
      %v482 = vsel %vm477, %v462, 0
      %v485 = vsel %vm477, %v463, 0
      %v488 = vsel %vm477, %v464, 0
      %v491 = vsel %vm477, %v465, 0
      %v494 = vsel %vm477, %v466, 0
      %v497 = vsel %vm477, %v467, 0
      %v500 = vsel %vm477, %v468, 0
      %v503 = vsel %vm477, %v469, 0
      %v506 = vsel %vm477, %v470, 0
      %v509 = vsel %vm477, %v471, 0
      %v512 = vsel %vm477, %v472, 0
      %v515 = vsel %vm477, %v473, 0
      %v518 = vsel %vm477, %v474, 0
      %v521 = vsel %vm477, %v475, 0
      %v524 = vsel %vm477, %v476, 0
      %vm526 = vcmask 1041408
      %v528 = vsel %vm526, %v396, 0
      %530 = vmatprep.subr.bf16.mxu0 0
      %531 = vmatpush1.bf16.msra.mxu0 %v528
      %532 = vmatprep.subr.bf16.mxu0 0
      %533 = vmatpush1.bf16.msra.mxu0 0
      %534 = vmatprep.subr.bf16.mxu0 0
      %535 = vmatpush1.bf16.msra.mxu0 0
      %536 = vmatprep.subr.bf16.mxu0 0
      %537 = vmatpush1.bf16.msra.mxu0 0
      %538 = vmatprep.subr.bf16.mxu0 0
      %539 = vmatpush1.bf16.msra.mxu0 0
      %540 = vmatprep.subr.bf16.mxu0 0
      %541 = vmatpush1.bf16.msra.mxu0 0
      %542 = vmatprep.subr.bf16.mxu0 0
      %543 = vmatpush1.bf16.msra.mxu0 0
      %544 = vmatprep.subr.bf16.mxu0 0
      %545 = vmatpush1.bf16.msra.mxu0 0
      %546 = vmatprep.subr.bf16.mxu0 0
      %547 = vmatpush1.bf16.msra.mxu0 0
      %548 = vmatprep.subr.bf16.mxu0 0
      %549 = vmatpush1.bf16.msra.mxu0 0
      %550 = vmatprep.subr.bf16.mxu0 0
      %551 = vmatpush1.bf16.msra.mxu0 0
      %552 = vmatprep.subr.bf16.mxu0 0
      %553 = vmatpush1.bf16.msra.mxu0 0
      %554 = vmatprep.subr.bf16.mxu0 0
      %555 = vmatpush1.bf16.msra.mxu0 0
      %556 = vmatprep.subr.bf16.mxu0 0
      %557 = vmatpush1.bf16.msra.mxu0 0
      %558 = vmatprep.subr.bf16.mxu0 0
      %559 = vmatpush1.bf16.msra.mxu0 0
      %560 = vmatprep.subr.bf16.mxu0 0
      %561 = vmatpush1.bf16.msra.mxu0 0
      %562 = vmatprep.mubr.bf16.mxu0 0
      %563 = vmatmul.mubr.bf16.gmra.mrb[0].mxu0 %v479
      %v564 = vpop.f32.mrb[0].mxu0
      %v565 = vadd.f32 0.0, %v564
      %v566 = vpop.f32.mrb[0].mxu0
      %v567 = vpop.f32.mrb[0].mxu0
      %v568 = vadd.f32 0.0, %v567
      %v569 = vpop.f32.mrb[0].mxu0
      %570 = vmatprep.mubr.bf16.mxu0 0
      %571 = vmatmul.mubr.bf16.gmra.mrb[0].mxu0 %v482
      %v572 = vpop.f32.mrb[0].mxu0
      %v573 = vadd.f32 0.0, %v572
      %v574 = vpop.f32.mrb[0].mxu0
      %v575 = vpop.f32.mrb[0].mxu0
      %v576 = vadd.f32 0.0, %v575
      %v577 = vpop.f32.mrb[0].mxu0
      %578 = vmatprep.mubr.bf16.mxu0 0
      %579 = vmatmul.mubr.bf16.gmra.mrb[0].mxu0 %v485
      %v580 = vpop.f32.mrb[0].mxu0
      %v581 = vadd.f32 0.0, %v580
      %v582 = vpop.f32.mrb[0].mxu0
      %v583 = vpop.f32.mrb[0].mxu0
      %v584 = vadd.f32 0.0, %v583
      %v585 = vpop.f32.mrb[0].mxu0
      %586 = vmatprep.mubr.bf16.mxu0 0
      %587 = vmatmul.mubr.bf16.gmra.mrb[0].mxu0 %v488
      %v588 = vpop.f32.mrb[0].mxu0
      %v589 = vadd.f32 0.0, %v588
      %v590 = vpop.f32.mrb[0].mxu0
      %v591 = vpop.f32.mrb[0].mxu0
      %v592 = vadd.f32 0.0, %v591
      %v593 = vpop.f32.mrb[0].mxu0
      %594 = vmatprep.mubr.bf16.mxu0 0
      %595 = vmatmul.mubr.bf16.gmra.mrb[0].mxu0 %v491
      %v596 = vpop.f32.mrb[0].mxu0
      %v597 = vadd.f32 0.0, %v596
      %v598 = vpop.f32.mrb[0].mxu0
      %v599 = vpop.f32.mrb[0].mxu0
      %v600 = vadd.f32 0.0, %v599
      %v601 = vpop.f32.mrb[0].mxu0
      %602 = vmatprep.mubr.bf16.mxu0 0
      %603 = vmatmul.mubr.bf16.gmra.mrb[0].mxu0 %v494
      %v604 = vpop.f32.mrb[0].mxu0
      %v605 = vadd.f32 0.0, %v604
      %v606 = vpop.f32.mrb[0].mxu0
      %v607 = vpop.f32.mrb[0].mxu0
      %v608 = vadd.f32 0.0, %v607
      %v609 = vpop.f32.mrb[0].mxu0
      %610 = vmatprep.mubr.bf16.mxu0 0
      %611 = vmatmul.mubr.bf16.gmra.mrb[0].mxu0 %v497
      %v612 = vpop.f32.mrb[0].mxu0
      %v613 = vadd.f32 0.0, %v612
      %v614 = vpop.f32.mrb[0].mxu0
      %v615 = vpop.f32.mrb[0].mxu0
      %v616 = vadd.f32 0.0, %v615
      %v617 = vpop.f32.mrb[0].mxu0
      %618 = vmatprep.mubr.bf16.mxu0 0
      %619 = vmatmul.mubr.bf16.gmra.mrb[0].mxu0 %v500
      %v620 = vpop.f32.mrb[0].mxu0
      %v621 = vadd.f32 0.0, %v620
      %v622 = vpop.f32.mrb[0].mxu0
      %v623 = vpop.f32.mrb[0].mxu0
      %v624 = vadd.f32 0.0, %v623
      %v625 = vpop.f32.mrb[0].mxu0
      %626 = vmatprep.mubr.bf16.mxu0 0
      %627 = vmatmul.mubr.bf16.gmra.mrb[0].mxu0 %v503
      %v628 = vpop.f32.mrb[0].mxu0
      %v629 = vadd.f32 0.0, %v628
      %v630 = vpop.f32.mrb[0].mxu0
      %v631 = vpop.f32.mrb[0].mxu0
      %v632 = vadd.f32 0.0, %v631
      %v633 = vpop.f32.mrb[0].mxu0
      %634 = vmatprep.mubr.bf16.mxu0 0
      %635 = vmatmul.mubr.bf16.gmra.mrb[0].mxu0 %v506
      %v636 = vpop.f32.mrb[0].mxu0
      %v637 = vadd.f32 0.0, %v636
      %v638 = vpop.f32.mrb[0].mxu0
      %v639 = vpop.f32.mrb[0].mxu0
      %v640 = vadd.f32 0.0, %v639
      %v641 = vpop.f32.mrb[0].mxu0
      %642 = vmatprep.mubr.bf16.mxu0 0
      %643 = vmatmul.mubr.bf16.gmra.mrb[0].mxu0 %v509
      %v644 = vpop.f32.mrb[0].mxu0
      %v645 = vadd.f32 0.0, %v644
      %v646 = vpop.f32.mrb[0].mxu0
      %v647 = vpop.f32.mrb[0].mxu0
      %v648 = vadd.f32 0.0, %v647
      %v649 = vpop.f32.mrb[0].mxu0
      %650 = vmatprep.mubr.bf16.mxu0 0
      %651 = vmatmul.mubr.bf16.gmra.mrb[0].mxu0 %v512
      %v652 = vpop.f32.mrb[0].mxu0
      %v653 = vadd.f32 0.0, %v652
      %v654 = vpop.f32.mrb[0].mxu0
      %v655 = vpop.f32.mrb[0].mxu0
      %v656 = vadd.f32 0.0, %v655
      %v657 = vpop.f32.mrb[0].mxu0
      %658 = vmatprep.mubr.bf16.mxu0 0
      %659 = vmatmul.mubr.bf16.gmra.mrb[0].mxu0 %v515
      %v660 = vpop.f32.mrb[0].mxu0
      %v661 = vadd.f32 0.0, %v660
      %v662 = vpop.f32.mrb[0].mxu0
      %v663 = vpop.f32.mrb[0].mxu0
      %v664 = vadd.f32 0.0, %v663
      %v665 = vpop.f32.mrb[0].mxu0
      %666 = vmatprep.mubr.bf16.mxu0 0
      %667 = vmatmul.mubr.bf16.gmra.mrb[0].mxu0 %v518
      %v668 = vpop.f32.mrb[0].mxu0
      %v669 = vadd.f32 0.0, %v668
      %v670 = vpop.f32.mrb[0].mxu0
      %v671 = vpop.f32.mrb[0].mxu0
      %v672 = vadd.f32 0.0, %v671
      %v673 = vpop.f32.mrb[0].mxu0
      %674 = vmatprep.mubr.bf16.mxu0 0
      %675 = vmatmul.mubr.bf16.gmra.mrb[0].mxu0 %v521
      %v676 = vpop.f32.mrb[0].mxu0
      %v677 = vadd.f32 0.0, %v676
      %v678 = vpop.f32.mrb[0].mxu0
      %v679 = vpop.f32.mrb[0].mxu0
      %v680 = vadd.f32 0.0, %v679
      %v681 = vpop.f32.mrb[0].mxu0
      %682 = vmatprep.mubr.bf16.mxu0 0
      %683 = vmatmul.mubr.bf16.gmra.mrb[0].mxu0 %v524
      %v684 = vpop.f32.mrb[0].mxu0
      %v685 = vadd.f32 0.0, %v684
      %v686 = vpop.f32.mrb[0].mxu0
      %v687 = vpop.f32.mrb[0].mxu0
      %v688 = vadd.f32 0.0, %v687
      %v689 = vpop.f32.mrb[0].mxu0
      %690 = vdwg.mxu0
      %v691 = vadd.f32 %v332, %v565
      %v692 = vadd.f32 %v333, %v568
      %v693 = vadd.f32 %v334, %v573
      %v694 = vadd.f32 %v335, %v576
      %v695 = vadd.f32 %v336, %v581
      %v696 = vadd.f32 %v337, %v584
      %v697 = vadd.f32 %v338, %v589
      %v698 = vadd.f32 %v339, %v592
      %v699 = vadd.f32 %v340, %v597
      %v700 = vadd.f32 %v341, %v600
      %v701 = vadd.f32 %v342, %v605
      %v702 = vadd.f32 %v343, %v608
      %v703 = vadd.f32 %v344, %v613
      %v704 = vadd.f32 %v345, %v616
      %v705 = vadd.f32 %v346, %v621
      %v706 = vadd.f32 %v347, %v624
      %v707 = vadd.f32 %v348, %v629
      %v708 = vadd.f32 %v349, %v632
      %v709 = vadd.f32 %v350, %v637
      %v710 = vadd.f32 %v351, %v640
      %v711 = vadd.f32 %v352, %v645
      %v712 = vadd.f32 %v353, %v648
      %v713 = vadd.f32 %v354, %v653
      %v714 = vadd.f32 %v355, %v656
      %v715 = vadd.f32 %v356, %v661
      %v716 = vadd.f32 %v357, %v664
      %v717 = vadd.f32 %v358, %v669
      %v718 = vadd.f32 %v359, %v672
      %v719 = vadd.f32 %v360, %v677
      %v720 = vadd.f32 %v361, %v680
      %v721 = vadd.f32 %v362, %v685
      %v722 = vadd.f32 %v363, %v688
      %723 = vst [vmem:[%s293] sm:$0xff] %v691
      %724 = vst [vmem:[%s293 + $0x8] sm:$0xff] %v692
      %725 = vst [vmem:[%s293 + $0x10] sm:$0xff] %v693
      %726 = vst [vmem:[%s293 + $0x18] sm:$0xff] %v694
      %727 = vst [vmem:[%s293 + $0x20] sm:$0xff] %v695
      %728 = vst [vmem:[%s293 + $0x28] sm:$0xff] %v696
      %729 = vst [vmem:[%s293 + $0x30] sm:$0xff] %v697
      %730 = vst [vmem:[%s293 + $0x38] sm:$0xff] %v698
      %731 = vst [vmem:[%s293 + $0x40] sm:$0xff] %v699
      %732 = vst [vmem:[%s293 + $0x48] sm:$0xff] %v700
      %733 = vst [vmem:[%s293 + $0x50] sm:$0xff] %v701
      %734 = vst [vmem:[%s293 + $0x58] sm:$0xff] %v702
      %735 = vst [vmem:[%s293 + $0x60] sm:$0xff] %v703
      %736 = vst [vmem:[%s293 + $0x68] sm:$0xff] %v704
      %737 = vst [vmem:[%s293 + $0x70] sm:$0xff] %v705
      %738 = vst [vmem:[%s293 + $0x78] sm:$0xff] %v706
      %739 = vst [vmem:[%s293 + $0x80] sm:$0xff] %v707
      %740 = vst [vmem:[%s293 + $0x88] sm:$0xff] %v708
      %741 = vst [vmem:[%s293 + $0x90] sm:$0xff] %v709
      %742 = vst [vmem:[%s293 + $0x98] sm:$0xff] %v710
      %743 = vst [vmem:[%s293 + $0xa0] sm:$0xff] %v711
      %744 = vst [vmem:[%s293 + $0xa8] sm:$0xff] %v712
      %745 = vst [vmem:[%s293 + $0xb0] sm:$0xff] %v713
      %746 = vst [vmem:[%s293 + $0xb8] sm:$0xff] %v714
      %747 = vst [vmem:[%s293 + $0xc0] sm:$0xff] %v715
      %748 = vst [vmem:[%s293 + $0xc8] sm:$0xff] %v716
      %749 = vst [vmem:[%s293 + $0xd0] sm:$0xff] %v717
      %750 = vst [vmem:[%s293 + $0xd8] sm:$0xff] %v718
      %751 = vst [vmem:[%s293 + $0xe0] sm:$0xff] %v719
      %752 = vst [vmem:[%s293 + $0xe8] sm:$0xff] %v720
      %753 = vst [vmem:[%s293 + $0xf0] sm:$0xff] %v721
      %754 = vst [vmem:[%s293 + $0xf8] sm:$0xff] %v722
      // Predicated region
      $region41: #{gemm_scale_shift_act.1} parent=35 // pred_check
        %p755 = pneg %p296
      $region42: #{gemm_scale_shift_act.1} parent=35 // pred_check_branch
        %757 = sbr.rel (%p755) target = $region44
      $region43: #{gemm_scale_shift_act.1} parent=35 // pred_region
        %v758 = vld [vmem:[%s293] sm:$0xff]
        %v759 = vld [vmem:[%s293 + $0x8] sm:$0xff]
        %v760 = vld [vmem:[%s293 + $0x10] sm:$0xff]
        %v761 = vld [vmem:[%s293 + $0x18] sm:$0xff]
        %v762 = vld [vmem:[%s293 + $0x20] sm:$0xff]
        %v763 = vld [vmem:[%s293 + $0x28] sm:$0xff]
        %v764 = vld [vmem:[%s293 + $0x30] sm:$0xff]
        %v765 = vld [vmem:[%s293 + $0x38] sm:$0xff]
        %v766 = vld [vmem:[%s293 + $0x40] sm:$0xff]
        %v767 = vld [vmem:[%s293 + $0x48] sm:$0xff]
        %v768 = vld [vmem:[%s293 + $0x50] sm:$0xff]
        %v769 = vld [vmem:[%s293 + $0x58] sm:$0xff]
        %v770 = vld [vmem:[%s293 + $0x60] sm:$0xff]
        %v771 = vld [vmem:[%s293 + $0x68] sm:$0xff]
        %v772 = vld [vmem:[%s293 + $0x70] sm:$0xff]
        %v773 = vld [vmem:[%s293 + $0x78] sm:$0xff]
        %v774 = vld [vmem:[%s293 + $0x80] sm:$0xff]
        %v775 = vld [vmem:[%s293 + $0x88] sm:$0xff]
        %v776 = vld [vmem:[%s293 + $0x90] sm:$0xff]
        %v777 = vld [vmem:[%s293 + $0x98] sm:$0xff]
        %v778 = vld [vmem:[%s293 + $0xa0] sm:$0xff]
        %v779 = vld [vmem:[%s293 + $0xa8] sm:$0xff]
        %v780 = vld [vmem:[%s293 + $0xb0] sm:$0xff]
        %v781 = vld [vmem:[%s293 + $0xb8] sm:$0xff]
        %v782 = vld [vmem:[%s293 + $0xc0] sm:$0xff]
        %v783 = vld [vmem:[%s293 + $0xc8] sm:$0xff]
        %v784 = vld [vmem:[%s293 + $0xd0] sm:$0xff]
        %v785 = vld [vmem:[%s293 + $0xd8] sm:$0xff]
        %v786 = vld [vmem:[%s293 + $0xe0] sm:$0xff]
        %v787 = vld [vmem:[%s293 + $0xe8] sm:$0xff]
        %v788 = vld [vmem:[%s293 + $0xf0] sm:$0xff]
        %v789 = vld [vmem:[%s293 + $0xf8] sm:$0xff]
        %v790 = vld [vmem:[%s282] sm:$0x1]
        %v792 = vlaneseq
        %v793 = vshrl.u32 %v792, 7
        %v794 = vsub.s32 0, %v793
        %v795 = vrot.slane %v790, %v794
        %v797 = vmul.f32 %v758, %v795
        %v798 = vmul.f32 %v759, %v795
        %v799 = vmul.f32 %v760, %v795
        %v800 = vmul.f32 %v761, %v795
        %v801 = vmul.f32 %v762, %v795
        %v802 = vmul.f32 %v763, %v795
        %v803 = vmul.f32 %v764, %v795
        %v804 = vmul.f32 %v765, %v795
        %v805 = vmul.f32 %v766, %v795
        %v806 = vmul.f32 %v767, %v795
        %v807 = vmul.f32 %v768, %v795
        %v808 = vmul.f32 %v769, %v795
        %v809 = vmul.f32 %v770, %v795
        %v810 = vmul.f32 %v771, %v795
        %v811 = vmul.f32 %v772, %v795
        %v812 = vmul.f32 %v773, %v795
        %v813 = vmul.f32 %v774, %v795
        %v814 = vmul.f32 %v775, %v795
        %v815 = vmul.f32 %v776, %v795
        %v816 = vmul.f32 %v777, %v795
        %v817 = vmul.f32 %v778, %v795
        %v818 = vmul.f32 %v779, %v795
        %v819 = vmul.f32 %v780, %v795
        %v820 = vmul.f32 %v781, %v795
        %v821 = vmul.f32 %v782, %v795
        %v822 = vmul.f32 %v783, %v795
        %v823 = vmul.f32 %v784, %v795
        %v824 = vmul.f32 %v785, %v795
        %v825 = vmul.f32 %v786, %v795
        %v826 = vmul.f32 %v787, %v795
        %v827 = vmul.f32 %v788, %v795
        %v828 = vmul.f32 %v789, %v795
        %v829 = vld [vmem:[%s285] sm:$0x1]
        %v831 = vlaneseq
        %v832 = vshrl.u32 %v831, 7
        %v833 = vsub.s32 0, %v832
        %v834 = vrot.slane %v829, %v833
        %v836 = vadd.f32 %v797, %v834
        %v837 = vadd.f32 %v798, %v834
        %v838 = vadd.f32 %v799, %v834
        %v839 = vadd.f32 %v800, %v834
        %v840 = vadd.f32 %v801, %v834
        %v841 = vadd.f32 %v802, %v834
        %v842 = vadd.f32 %v803, %v834
        %v843 = vadd.f32 %v804, %v834
        %v844 = vadd.f32 %v805, %v834
        %v845 = vadd.f32 %v806, %v834
        %v846 = vadd.f32 %v807, %v834
        %v847 = vadd.f32 %v808, %v834
        %v848 = vadd.f32 %v809, %v834
        %v849 = vadd.f32 %v810, %v834
        %v850 = vadd.f32 %v811, %v834
        %v851 = vadd.f32 %v812, %v834
        %v852 = vadd.f32 %v813, %v834
        %v853 = vadd.f32 %v814, %v834
        %v854 = vadd.f32 %v815, %v834
        %v855 = vadd.f32 %v816, %v834
        %v856 = vadd.f32 %v817, %v834
        %v857 = vadd.f32 %v818, %v834
        %v858 = vadd.f32 %v819, %v834
        %v859 = vadd.f32 %v820, %v834
        %v860 = vadd.f32 %v821, %v834
        %v861 = vadd.f32 %v822, %v834
        %v862 = vadd.f32 %v823, %v834
        %v863 = vadd.f32 %v824, %v834
        %v864 = vadd.f32 %v825, %v834
        %v865 = vadd.f32 %v826, %v834
        %v866 = vadd.f32 %v827, %v834
        %v867 = vadd.f32 %v828, %v834
        %868 = vst [vmem:[%s293] sm:$0xff] %v836
        %869 = vst [vmem:[%s293 + $0x8] sm:$0xff] %v837
        %870 = vst [vmem:[%s293 + $0x10] sm:$0xff] %v838
        %871 = vst [vmem:[%s293 + $0x18] sm:$0xff] %v839
        %872 = vst [vmem:[%s293 + $0x20] sm:$0xff] %v840
        %873 = vst [vmem:[%s293 + $0x28] sm:$0xff] %v841
        %874 = vst [vmem:[%s293 + $0x30] sm:$0xff] %v842
        %875 = vst [vmem:[%s293 + $0x38] sm:$0xff] %v843
        %876 = vst [vmem:[%s293 + $0x40] sm:$0xff] %v844
        %877 = vst [vmem:[%s293 + $0x48] sm:$0xff] %v845
        %878 = vst [vmem:[%s293 + $0x50] sm:$0xff] %v846
        %879 = vst [vmem:[%s293 + $0x58] sm:$0xff] %v847
        %880 = vst [vmem:[%s293 + $0x60] sm:$0xff] %v848
        %881 = vst [vmem:[%s293 + $0x68] sm:$0xff] %v849
        %882 = vst [vmem:[%s293 + $0x70] sm:$0xff] %v850
        %883 = vst [vmem:[%s293 + $0x78] sm:$0xff] %v851
        %884 = vst [vmem:[%s293 + $0x80] sm:$0xff] %v852
        %885 = vst [vmem:[%s293 + $0x88] sm:$0xff] %v853
        %886 = vst [vmem:[%s293 + $0x90] sm:$0xff] %v854
        %887 = vst [vmem:[%s293 + $0x98] sm:$0xff] %v855
        %888 = vst [vmem:[%s293 + $0xa0] sm:$0xff] %v856
        %889 = vst [vmem:[%s293 + $0xa8] sm:$0xff] %v857
        %890 = vst [vmem:[%s293 + $0xb0] sm:$0xff] %v858
        %891 = vst [vmem:[%s293 + $0xb8] sm:$0xff] %v859
        %892 = vst [vmem:[%s293 + $0xc0] sm:$0xff] %v860
        %893 = vst [vmem:[%s293 + $0xc8] sm:$0xff] %v861
        %894 = vst [vmem:[%s293 + $0xd0] sm:$0xff] %v862
        %895 = vst [vmem:[%s293 + $0xd8] sm:$0xff] %v863
        %896 = vst [vmem:[%s293 + $0xe0] sm:$0xff] %v864
        %897 = vst [vmem:[%s293 + $0xe8] sm:$0xff] %v865
        %898 = vst [vmem:[%s293 + $0xf0] sm:$0xff] %v866
        %899 = vst [vmem:[%s293 + $0xf8] sm:$0xff] %v867
      $region44: #{gemm_scale_shift_act.1} parent=35 // pred_fallthru
        _
      %s900 = smul.u32 32, %s20
      %p901 = scmp.lt.s32.totalorder %s900, 255
      %s902 = scalar_select %p901, %s900, 255
      %p903 = scmp.lt.s32.totalorder %s21, 0
      %s904 = scalar_select %p903, %s21, 0
      %s905 = sadd.s32 %s904, %s902
      %s906 = smul.addr %s905, 8
      %s907 = scalar_lea.vmem %s4, %s906
      // Predicated region
      $region45: #{gemm_scale_shift_act.1} parent=35 // pred_check
        %p908 = pneg %p162
      $region46: #{gemm_scale_shift_act.1} parent=35 // pred_check_branch
        %910 = sbr.rel (%p908) target = $region48
      $region47: #{gemm_scale_shift_act.1} parent=35 // pred_region
        %s911 = smul.u32 32, %s20
      $region48: #{gemm_scale_shift_act.1} parent=35 // pred_fallthru
        _
    $region36: #{gemm_scale_shift_act.1} parent=5 // pred_fallthru
      _
    %p912 = scmp.le.s32.totalorder 2, %s10
    // Predicated region
    $region49: #{gemm_scale_shift_act.1} parent=5 // pred_check
      %p913 = pneg %p912
    $region50: #{gemm_scale_shift_act.1} parent=5 // pred_check_branch
      %915 = sbr.rel (%p913) target = $region52
    $region51: #{gemm_scale_shift_act.1} parent=5 // pred_region
      %s916 = ssub.s32 %s10, 2
      // Predicated region
      $region53: #{gemm_scale_shift_act.1} parent=51 // pred_check
        %p917 = pneg %p168
      $region54: #{gemm_scale_shift_act.1} parent=51 // pred_check_branch
        %919 = sbr.rel (%p917) target = $region56
      $region55: #{gemm_scale_shift_act.1} parent=51 // pred_region
        %s920 = smul.u32 32, %s23
        %p921 = scmp.lt.s32.totalorder %s920, 255
        %s922 = scalar_select %p921, %s920, 255
        %p923 = scmp.lt.s32.totalorder %s24, 0
        %s924 = scalar_select %p923, %s24, 0
        %s925 = sadd.s32 %s924, %s922
        %s926 = smul.addr %s925, 8
        %s927 = scalar_lea.vmem %s4, %s926
      $region56: #{gemm_scale_shift_act.1} parent=51 // pred_fallthru
        _
    $region52: #{gemm_scale_shift_act.1} parent=5 // pred_fallthru
      _
  $region6: #{gemm_scale_shift_act.1} parent=0 // loop_footer
    %s14 = sadd.s32 1, %s10
  $region7: #{gemm_scale_shift_act.1} parent=0 // loop_footer_branch
    %9 = sbr.rel target = $region3
  $region8: #{gemm_scale_shift_act.1} parent=0 // loop_exit
    _

</llo_original>
